<compile_context>
chip_gen: v7x
topology: tpu7x:2x2x1
jax: 0.10.0
libtpu: 0.0.40
codegen_flags: <defaults>
</compile_context>

<pallas_src>
import jax
import jax.numpy as jnp
from jax import lax
from jax.experimental import pallas as pl
from jax.experimental.pallas import tpu as pltpu


def _round_up(x, m):
    return ((x + m - 1) // m) * m


def flavio_kernel(x_ref, v_ref, o_ref):
    # x_ref: (TB, feat)  batch tile of flattened inputs (stream dtype)
    # v_ref: (1, feat)   folded vector v = reg @ W (stream dtype), resident
    # o_ref: (1, TB)     lane-dense per-row outputs (f32)
    o_ref[...] = lax.dot_general(
        v_ref[...], x_ref[...],
        dimension_numbers=(((1,), (1,)), ((), ())),
        preferred_element_type=jnp.float32)


def flavio_forward(x, w, reg, *, max_block_rows=None):
    """FlavioNet forward: sum((x.reshape(B,-1) @ W.T) * reg, axis=1) -> (B,) f32."""
    B, S, F = x.shape
    feat = S * F
    dim = w.shape[0]
    assert w.shape == (dim, feat)
    assert reg.shape == (dim,)

    # Algebraic fold, hoisted out of the kernel:
    #   sum_d (x @ W^T)[:, d] * reg[d]  ==  x @ (reg @ W)^T
    v = jnp.einsum("d,df->f",
                   reg.astype(jnp.float32), w.astype(jnp.float32),
                   precision=lax.Precision.HIGHEST).reshape(1, feat)

    # Stream x in its incoming dtype (bf16 recommended upstream); only fall back
    # to f32 for exotic dtypes. No forced f32 upcast, no wrapper-side bf16 cast.
    x_flat = x.reshape(B, feat)
    if x_flat.dtype not in (jnp.bfloat16, jnp.float32):
        x_flat = x_flat.astype(jnp.float32)
    stream_dtype = x_flat.dtype
    v = v.astype(stream_dtype)
    itemsize = jnp.dtype(stream_dtype).itemsize

    # ---- Batch-tile sizing from an explicit per-generation VMEM budget ----
    try:
        vmem_cap = int(pltpu.get_tpu_info().vmem_capacity_bytes)
    except Exception:
        vmem_cap = 64 * 1024 * 1024               # conservative (v7x per-TC)
    block_budget = min(16 << 20, vmem_cap // 8)   # one x block (double-buffered)
    budget_rows = max(8, (block_budget // (feat * itemsize)) // 8 * 8)
    if max_block_rows is not None:
        budget_rows = max(8, min(budget_rows, (max_block_rows // 8) * 8))
    # TODO(synk): if feat ever grows so large that even an (8, feat) block blows
    # this budget, add a trailing "arbitrary" grid axis over feat with a
    # pl.when-initialized accumulator instead of shrinking the batch tile.

    if budget_rows >= _round_up(B, 8):
        tb = _round_up(B, 8)                       # single block: out block == out array
    else:
        tb = max(128, (budget_rows // 128) * 128)  # multi-block: 128-aligned (lane-dense)

    grid = -(-B // tb)
    out_cols = grid * tb                           # out over-allocated to whole blocks

    needed = 2 * tb * feat * itemsize + 2 * tb * 4 + 2 * feat * itemsize
    vmem_limit = int(min(vmem_cap, max(needed + (4 << 20), 16 << 20)))

    out = pl.pallas_call(
        flavio_kernel,
        out_shape=jax.ShapeDtypeStruct((1, out_cols), jnp.float32),
        grid_spec=pl.GridSpec(
            grid=(grid,),
            in_specs=[
                pl.BlockSpec((tb, feat), lambda i: (i, 0)),   # x: tiled over batch
                pl.BlockSpec((1, feat), lambda i: (0, 0)),    # v: resident, tiny
            ],
            out_specs=pl.BlockSpec((1, tb), lambda i: (0, i)),
        ),
        compiler_params=pltpu.CompilerParams(
            dimension_semantics=("parallel",),                # megacore-shardable
            vmem_limit_bytes=vmem_limit,
        ),
    )(x_flat, v)
    return out[0, :B]


if __name__ == "__main__":
    key = jax.random.PRNGKey(0)
    kx, kw, kr, kx2 = jax.random.split(key, 4)

    # Small shapes consistent with the module: x (B=2, S=8, F=16) -> feat=128, dim=32
    B, S, F = 2, 8, 16
    feat = S * F
    dim = 32

    x = jax.random.normal(kx, (B, S, F), dtype=jnp.float32)
    # Param init mirroring torch defaults:
    #   nn.Linear weight ~ U(-1/sqrt(feat), 1/sqrt(feat)); reg ~ U(0, 1)
    bound = 1.0 / (feat ** 0.5)
    w = jax.random.uniform(kw, (dim, feat), dtype=jnp.float32,
                           minval=-bound, maxval=bound)
    reg = jax.random.uniform(kr, (dim,), dtype=jnp.float32)

    out = flavio_forward(x, w, reg)
    jax.block_until_ready(out)
    ref = jnp.sum((x.reshape(B, feat) @ w.T) * reg[None, :], axis=1)
    assert out.shape == (B,)
    assert jnp.allclose(out, ref, atol=2e-4, rtol=2e-4)

    # Larger batch: bf16 x stream + forced multi-block grid (exercises the
    # 128-aligned tiles and the partial trailing x block, no jnp.pad copy).
    B2 = 1000
    x2 = jax.random.normal(kx2, (B2, S, F), dtype=jnp.float32)
    out2 = flavio_forward(x2.astype(jnp.bfloat16), w, reg, max_block_rows=256)
    jax.block_until_ready(out2)
    ref2 = jnp.sum((x2.reshape(B2, feat) @ w.T) * reg[None, :], axis=1)
    assert out2.shape == (B2,)
    # bf16 stream loosens the match against the f32 reference.
    assert jnp.allclose(out2, ref2, atol=1e-1, rtol=5e-2)

    print("KERNEL_OK")
</pallas_src>

<mosaic_0001>
module attributes {stable_mosaic.version = 11 : i64} {
  func.func @flavio_kernel(%arg0: i32, %arg1: memref<8x128xf32, #tpu.memory_space<vmem>>, %arg2: memref<1x128xf32, #tpu.memory_space<vmem>>, %arg3: memref<1x8xf32, #tpu.memory_space<vmem>>) attributes {dimension_semantics = [#tpu.dimension_semantics<parallel>], iteration_bounds = array<i64: 1>, scalar_prefetch = 0 : i64, scratch_operands = 0 : i64, tpu.core_type = #tpu.core_type<tc>, window_params = [{transform_indices = @transform_0, window_bounds = array<i64: 8, 128>}, {pipeline_mode = #tpu.pipeline_mode<synchronous>, transform_indices = @transform_1, window_bounds = array<i64: 1, 128>}, {transform_indices = @transform_2, window_bounds = array<i64: 1, 8>}]} {
    %c0 = arith.constant 0 : index
    %c0_0 = arith.constant 0 : index
    %0 = vector.load %arg2[%c0, %c0_0] : memref<1x128xf32, #tpu.memory_space<vmem>>, vector<1x128xf32>
    %c0_1 = arith.constant 0 : index
    %c0_2 = arith.constant 0 : index
    %1 = vector.load %arg1[%c0_1, %c0_2] : memref<8x128xf32, #tpu.memory_space<vmem>>, vector<8x128xf32>
    %cst = arith.constant dense<0.000000e+00> : vector<1x8xf32>
    %2 = tpu.matmul %0, %1, %cst {dimension_numbers = #tpu.dot_dimension_numbers<[1], [1], [0], [0], [0, 0, 1, 0], [], []>} : vector<1x128xf32>, vector<8x128xf32>, vector<1x8xf32> -> vector<1x8xf32>
    %c0_3 = arith.constant 0 : index
    %c0_4 = arith.constant 0 : index
    %3 = vector.load %arg3[%c0_3, %c0_4] : memref<1x8xf32, #tpu.memory_space<vmem>>, vector<1x8xf32>
    tpu.vector_store %arg3[%c0_3, %c0_4], %2 {strides = array<i32>} : memref<1x8xf32, #tpu.memory_space<vmem>>, vector<1x8xf32>,
    return
  }
  func.func @transform_0(%arg0: i32) -> (i32, i32) {
    %c0_i32 = arith.constant 0 : i32
    %c0_i32_0 = arith.constant 0 : i32
    return %arg0, %c0_i32 : i32, i32
  }
  func.func @transform_1(%arg0: i32) -> (i32, i32) {
    %c0_i32 = arith.constant 0 : i32
    %c0_i32_0 = arith.constant 0 : i32
    %c0_i32_1 = arith.constant 0 : i32
    return %c0_i32, %c0_i32_0 : i32, i32
  }
  func.func @transform_2(%arg0: i32) -> (i32, i32) {
    %c0_i32 = arith.constant 0 : i32
    %c0_i32_0 = arith.constant 0 : i32
    return %c0_i32, %arg0 : i32, i32
  }
}

</mosaic_0001>

<llo_original>
// kernel: tpu_custom_call.1
$region0: #{tpu_custom_call.1}
  #allocation0 [shape = 'u32[]', space=smem, size = 0x4, offset = 0x4, fixed_abs, tag = 'smem constant byte address 0x4 - core index']
  #allocation1 [shape = 'u32[144,128]{1,0:T(1,128)}', space=vmem, size = 0x12000, scoped, tag = 'internal scratch']
  %s0 = inlined_call_operand.hbm [shape: f32[2,128], index: 0, kind: input, shape index: {}]
  %s1 = inlined_call_operand.vmem [shape: f32[1,128], index: 1, kind: input, shape index: {}]
  %s2 = inlined_call_operand.hbm [shape: f32[1,8], index: 2, kind: output, shape index: {}]
  %s3 = sld [smem:[#allocation0]]
  $region22: #{tpu_custom_call.1} parent=0
    _
  %s5 = ssub.s32 1, %s3
  %s6 = scalar_select 0, %s5, %s3
  $region1: #{tpu_custom_call.1} parent=0
    #allocation2 [shape = 'u8[4096]{0}', space=vmem, size = 0x1000, scoped, tag = 'input window, operand 0, single buffered']
    #allocation3 [shape = 's32[1]{0}', space=sflag, size = 0x4, scoped, tag = 'scoped memory for tpu_custom_call.1']
    #allocation4 [shape = 's32[1]{0}', space=sflag, size = 0x4, scoped, tag = 'scoped memory for tpu_custom_call.1']
    #allocation5 [shape = 'u8[512]{0}', space=vmem, size = 0x400, scoped, tag = 'output window, operand 0, single buffered']
    %7 = vsyncpa [#allocation3], 0
    %8 = vsyncpa [#allocation4], 0
    // Predicated region
    $region2: #{tpu_custom_call.1} parent=1 // pred_check
      _
    $region3: #{tpu_custom_call.1} parent=1 // pred_check_branch
      %10 = sbr.rel (0) target = $region5
    $region4: #{tpu_custom_call.1} parent=1 // pred_region
      %s12 = ssub.s32 128, 32
      %13 = vsyncadd [#allocation3], %s12
      %s14 = sshll.u32 [#allocation2], 4
      %s15 = int_to_ptr.vmem [resolvable:$true] %s14
      %20 = dma.hbm_to_vmem [thread:$0]  %s0, 32, %s15, [#allocation3], 32, 32, 2
    $region5: #{tpu_custom_call.1} parent=1 // pred_fallthru
      _
    // Predicated region
    $region6: #{tpu_custom_call.1} parent=1 // pred_check
      _
    $region7: #{tpu_custom_call.1} parent=1 // pred_check_branch
      %22 = sbr.rel (0) target = $region9
    $region8: #{tpu_custom_call.1} parent=1 // pred_region
      _
    $region9: #{tpu_custom_call.1} parent=1 // pred_fallthru
      _
    // Predicated region
    $region10: #{tpu_custom_call.1} parent=1 // pred_check
      _
    $region11: #{tpu_custom_call.1} parent=1 // pred_check_branch
      %24 = sbr.rel (0) target = $region13
    $region12: #{tpu_custom_call.1} parent=1 // pred_region
      %25 = dma.done [#allocation3], 128
    $region13: #{tpu_custom_call.1} parent=1 // pred_fallthru
      _
    %v26 = vld [vmem:[%s1] sm:$0x1]
    %v27 = vld [vmem:[#allocation2] sm:$0xff]
    %28 = vmatprep.subr.mxu0 0.0
    %29 = vmatpush1.xpose.msra.mxu0 %v27
    %30 = vmatprep.subr.mxu0 0.0
    %31 = vmatpush1.xpose.msra.mxu0 0.0
    %32 = vmatprep.subr.mxu0 0.0
    %33 = vmatpush1.xpose.msra.mxu0 0.0
    %34 = vmatprep.subr.mxu0 0.0
    %35 = vmatpush1.xpose.msra.mxu0 0.0
    %36 = vmatprep.subr.mxu0 0.0
    %37 = vmatpush1.xpose.msra.mxu0 0.0
    %38 = vmatprep.subr.mxu0 0.0
    %39 = vmatpush1.xpose.msra.mxu0 0.0
    %40 = vmatprep.subr.mxu0 0.0
    %41 = vmatpush1.xpose.msra.mxu0 0.0
    %42 = vmatprep.subr.mxu0 0.0
    %43 = vmatpush1.xpose.msra.mxu0 0.0
    %44 = vmatprep.subr.mxu0 0.0
    %45 = vmatpush1.xpose.msra.mxu0 0.0
    %46 = vmatprep.subr.mxu0 0.0
    %47 = vmatpush1.xpose.msra.mxu0 0.0
    %48 = vmatprep.subr.mxu0 0.0
    %49 = vmatpush1.xpose.msra.mxu0 0.0
    %50 = vmatprep.subr.mxu0 0.0
    %51 = vmatpush1.xpose.msra.mxu0 0.0
    %52 = vmatprep.subr.mxu0 0.0
    %53 = vmatpush1.xpose.msra.mxu0 0.0
    %54 = vmatprep.subr.mxu0 0.0
    %55 = vmatpush1.xpose.msra.mxu0 0.0
    %56 = vmatprep.subr.mxu0 0.0
    %57 = vmatpush1.xpose.msra.mxu0 0.0
    %58 = vmatprep.subr.mxu0 0.0
    %59 = vmatpush1.xpose.msra.mxu0 0.0
    %60 = vmatprep.subr.mxu0 0.0
    %61 = vmatpush1.xpose.msra.mxu0 0.0
    %62 = vmatprep.subr.mxu0 0.0
    %63 = vmatpush1.xpose.msra.mxu0 0.0
    %64 = vmatprep.subr.mxu0 0.0
    %65 = vmatpush1.xpose.msra.mxu0 0.0
    %66 = vmatprep.subr.mxu0 0.0
    %67 = vmatpush1.xpose.msra.mxu0 0.0
    %68 = vmatprep.subr.mxu0 0.0
    %69 = vmatpush1.xpose.msra.mxu0 0.0
    %70 = vmatprep.subr.mxu0 0.0
    %71 = vmatpush1.xpose.msra.mxu0 0.0
    %72 = vmatprep.subr.mxu0 0.0
    %73 = vmatpush1.xpose.msra.mxu0 0.0
    %74 = vmatprep.subr.mxu0 0.0
    %75 = vmatpush1.xpose.msra.mxu0 0.0
    %76 = vmatprep.subr.mxu0 0.0
    %77 = vmatpush1.xpose.msra.mxu0 0.0
    %78 = vmatprep.subr.mxu0 0.0
    %79 = vmatpush1.xpose.msra.mxu0 0.0
    %80 = vmatprep.subr.mxu0 0.0
    %81 = vmatpush1.xpose.msra.mxu0 0.0
    %82 = vmatprep.subr.mxu0 0.0
    %83 = vmatpush1.xpose.msra.mxu0 0.0
    %84 = vmatprep.subr.mxu0 0.0
    %85 = vmatpush1.xpose.msra.mxu0 0.0
    %86 = vmatprep.subr.mxu0 0.0
    %87 = vmatpush1.xpose.msra.mxu0 0.0
    %88 = vmatprep.subr.mxu0 0.0
    %89 = vmatpush1.xpose.msra.mxu0 0.0
    %90 = vmatprep.subr.mxu0 0.0
    %91 = vmatpush1.xpose.msra.mxu0 0.0
    %92 = vmatprep.mubr.f32.mxu0 0.0
    %93 = vmatmul.mubr.f32.gmra.mrb[0].mxu0 %v26
    %v94 = vpop.f32.mrb[0].mxu0
    %v95 = vadd.f32 0.0, %v94
    %v96 = vpop.f32.mrb[0].mxu0
    %97 = vdwg.mxu0
    %vm98 = vcmask 57344
    %99 = vst.msk [vmem:[#allocation5] sm:$0x1] %vm98, %v95
    // Predicated region
    $region14: #{tpu_custom_call.1} parent=1 // pred_check
      _
    $region15: #{tpu_custom_call.1} parent=1 // pred_check_branch
      %101 = sbr.rel (0) target = $region17
    $region16: #{tpu_custom_call.1} parent=1 // pred_region
      %s103 = ssub.s32 16, 16
      %104 = vsyncadd [#allocation4], %s103
      %s106 = sshll.u32 [#allocation5], 4
      %s107 = int_to_ptr.vmem [resolvable:$true] %s106
      %109 = dma.vmem_to_hbm [thread:$0]  %s107, 16, %s2, [#allocation4]
    $region17: #{tpu_custom_call.1} parent=1 // pred_fallthru
      _
    // Predicated region
    $region18: #{tpu_custom_call.1} parent=1 // pred_check
      _
    $region19: #{tpu_custom_call.1} parent=1 // pred_check_branch
      %111 = sbr.rel (0) target = $region21
    $region20: #{tpu_custom_call.1} parent=1 // pred_region
      %112 = dma.done [#allocation4], 16
    $region21: #{tpu_custom_call.1} parent=1 // pred_fallthru
      _
    %113 = vsyncpa [#allocation3], 1
    %114 = vsyncpa [#allocation4], 1

</llo_original>
